<compile_context>
chip_gen: v5e
topology: v5e:2x2
jax: 0.10.0
libtpu: 0.0.40
codegen_flags: <defaults>
</compile_context>

<pallas_src>
import jax
import jax.numpy as jnp
from jax.experimental import pallas as pl
from jax.experimental.pallas import tpu as pltpu


def _vmem_capacity_bytes():
    try:
        return int(pltpu.get_tpu_info().vmem_capacity_bytes)
    except Exception:
        return 64 * 1024 * 1024  # conservative: v7x per-TC VMEM


def _pick_batch_block(n, per_batch_bytes, budget):
    """Divisor nb of n giving ~>=1 MiB per grid step within the VMEM budget.

    Keeps >= 2 grid steps when n >= 2 (so both v7x TensorCores can be fed) and caps the
    in-kernel unroll at 16.
    """
    divisors = [d for d in range(1, n + 1) if n % d == 0]
    cand = [d for d in divisors if d <= max(1, n // 2) and d <= 16] or [1]
    target = 1 << 20  # ~1 MiB/step amortizes the ~0.35 us per-grid-step overhead
    nb = cand[0]
    for d in cand:
        if 4 * d * per_batch_bytes > budget:
            break
        nb = d
        if d * per_batch_bytes >= target:
            break
    return nb


# ----------------------------------------------------------------------------------
# Single-pass kernel: nb batch elements per grid step (one HBM read + one write).
# ----------------------------------------------------------------------------------
def _se_fused_kernel(x_ref, w1_ref, b1_ref, w2_ref, b2_ref, o_ref):
    # x_ref: (nb, C, HW). nb is a small trace-time constant; the unrolled loop keeps
    # every op 2-D (layouts known to lower cleanly) while amortizing per-step overhead.
    for i in range(x_ref.shape[0]):
        x = x_ref[i]                                                    # (C, HW), native dtype
        # squeeze: f32-accumulated global average pool; 1/HW is pre-folded into w1.
        pooled = jnp.sum(x, axis=-1, keepdims=True, dtype=jnp.float32)  # (C, 1) raw sum
        # fc1 (1x1 conv == matmul) + ReLU
        s1 = jnp.dot(w1_ref[...], pooled, preferred_element_type=jnp.float32) + b1_ref[...]
        s1 = jnp.maximum(s1, 0.0)                                       # (Csq, 1)
        # fc2 + sigmoid
        s2 = jnp.dot(w2_ref[...], s1, preferred_element_type=jnp.float32) + b2_ref[...]
        scale = jax.nn.sigmoid(s2)                                      # (C, 1) f32
        # excite in the native dtype: cast the tiny scale down, never the big tile up.
        o_ref[i] = x * scale.astype(o_ref.dtype)


# ----------------------------------------------------------------------------------
# Two-pass fallback for tiles that don't fit VMEM (esp. v7x 64 MiB, huge HW, small N).
# ----------------------------------------------------------------------------------
def _se_pool_kernel(x_ref, o_ref):
    # Pooled sums accumulated directly in the resident f32 output block.
    @pl.when(pl.program_id(1) == 0)
    def _():
        o_ref[...] = jnp.zeros_like(o_ref)

    o_ref[...] += jnp.sum(x_ref[...], axis=-1, keepdims=True, dtype=jnp.float32)


def _se_apply_kernel(x_ref, s_ref, o_ref):
    o_ref[...] = x_ref[...] * s_ref[...].astype(o_ref.dtype)


# ----------------------------------------------------------------------------------
# Wrapper
# ----------------------------------------------------------------------------------
def squeeze_excitation(x, w1, b1, w2, b2, *, force_two_pass=False, lane_tile=None):
    """x: (N, C, H, W); w1: (Csq, C); b1: (Csq,); w2: (C, Csq); b2: (C,)."""
    N, C, H, W = x.shape
    HW = H * W
    Csq = w1.shape[0]
    itemsize = jnp.dtype(x.dtype).itemsize
    inv_hw = 1.0 / float(HW)

    # (N, C, H, W) -> (N, C, HW): contiguous metadata reshape, NOT an HBM copy.
    x2 = x.reshape(N, C, HW)

    # Tiny params in f32.
    w1f = w1.astype(jnp.float32)
    b1f = b1.astype(jnp.float32)
    w2f = w2.astype(jnp.float32)
    b2f = b2.astype(jnp.float32)
    weight_bytes = 4 * (Csq * C + Csq + C * Csq + C)

    # ---- Generation-aware VMEM budgeting ------------------------------------------
    vmem_cap = _vmem_capacity_bytes()
    headroom = 12 << 20                              # compiler scratch / semaphores
    hard_cap = max(vmem_cap - headroom, 32 << 20)    # never request full physical VMEM
    likely_small_vmem = vmem_cap <= (80 << 20)       # 64-MiB per-TC parts (v7x-class)
    # v5e/v6e have 128 MiB physical VMEM -> a much larger single-pass budget is safe.
    budget = min(int(vmem_cap * (0.45 if likely_small_vmem else 0.70)), hard_cap)

    per_batch_bytes = C * HW * itemsize
    nb = _pick_batch_block(N, per_batch_bytes, budget - 2 * weight_bytes)
    step_bytes = nb * per_batch_bytes
    single_pass_need = 4 * step_bytes + 2 * weight_bytes  # dbl-buffered in + out + params

    # v7x has two TensorCores per chip: with a single batch element the single-pass grid
    # (1,) keeps only one of them busy, so prefer the HW-split two-pass path there.
    prefer_split = likely_small_vmem and N == 1 and per_batch_bytes >= (8 << 20)

    if not force_two_pass and not prefer_split and single_pass_need <= budget:
        vmem_limit = int(min(max(single_pass_need * 5 // 4 + (4 << 20), 32 << 20), hard_cap))
        # Fold 1/HW into fc1: fc1(mean) == (w1/HW) @ pooled_sum + b1.
        w1c = w1f * inv_hw                          # (Csq, C)
        b1c = b1f.reshape(Csq, 1)
        w2c = w2f                                   # (C, Csq)
        b2c = b2f.reshape(C, 1)
        cost = pl.CostEstimate(
            flops=int(2 * N * C * HW + 4 * N * C * Csq),
            transcendentals=int(N * (C + Csq)),
            bytes_accessed=int(2 * N * C * HW * itemsize + weight_bytes))
        out = pl.pallas_call(
            _se_fused_kernel,
            out_shape=jax.ShapeDtypeStruct((N, C, HW), x.dtype),
            grid_spec=pltpu.PrefetchScalarGridSpec(
                num_scalar_prefetch=0,
                grid=(N // nb,),
                in_specs=[
                    pl.BlockSpec((nb, C, HW), lambda n: (n, 0, 0)),   # x tile (true HW)
                    pl.BlockSpec((Csq, C), lambda n: (0, 0)),         # fc1 weight / HW
                    pl.BlockSpec((Csq, 1), lambda n: (0, 0)),         # fc1 bias
                    pl.BlockSpec((C, Csq), lambda n: (0, 0)),         # fc2 weight
                    pl.BlockSpec((C, 1), lambda n: (0, 0)),           # fc2 bias
                ],
                out_specs=pl.BlockSpec((nb, C, HW), lambda n: (n, 0, 0)),
            ),
            compiler_params=pltpu.CompilerParams(
                dimension_semantics=("parallel",),
                vmem_limit_bytes=vmem_limit),
            cost_estimate=cost,
            # No aliasing here: x2 aliases the caller's live x (a reshape); donating it
            # would either clobber a user buffer or force a hidden defensive copy.
        )(x2, w1c, b1c, w2c, b2c)
        return out.reshape(N, C, H, W)

    # ---- Two-pass fallback ---------------------------------------------------------
    if lane_tile is None:
        # thw ~ min(8 MiB, budget/6) per tile, floored to a multiple of 128 lanes.
        per_lane_bytes = C * itemsize
        thw = min(8 << 20, max(budget // 6, 1 << 20)) // per_lane_bytes
        thw = max(128, (thw // 128) * 128)
        thw = min(thw, ((HW + 127) // 128) * 128)   # no point exceeding lane-padded HW
    else:
        thw = int(lane_tile)
        if thw % 128 != 0:
            raise ValueError("lane_tile must be a multiple of 128")

    HWp = ((HW + thw - 1) // thw) * thw
    if HWp != HW:
        # Zero padding leaves the pooled *sum* unchanged (we divide by the true HW).
        x2 = jnp.pad(x2, ((0, 0), (0, 0), (0, HWp - HW)))
    n_hw = HWp // thw
    tile_bytes = C * thw * itemsize
    vmem_limit = int(min(max(4 * tile_bytes * 5 // 4 + (4 << 20), 32 << 20), hard_cap))

    # Pass 1: pooled sums per batch element (no weights in-kernel).
    pooled_sums = pl.pallas_call(
        _se_pool_kernel,
        out_shape=jax.ShapeDtypeStruct((N, C, 1), jnp.float32),
        grid_spec=pltpu.PrefetchScalarGridSpec(
            num_scalar_prefetch=0,
            grid=(N, n_hw),                                   # reduction axis last
            in_specs=[pl.BlockSpec((1, C, thw), lambda n, h: (n, 0, h))],
            out_specs=pl.BlockSpec((1, C, 1), lambda n, h: (n, 0, 0)),
        ),
        compiler_params=pltpu.CompilerParams(
            dimension_semantics=("parallel", "arbitrary"),
            vmem_limit_bytes=vmem_limit),
        cost_estimate=pl.CostEstimate(
            flops=int(N * C * HWp),
            transcendentals=0,
            bytes_accessed=int(N * C * HWp * itemsize + N * C * 4)),
    )(x2)

    # Tiny FCs + sigmoid in plain JAX between the passes (negligible work).
    pooled = pooled_sums[:, :, 0] * inv_hw                    # (N, C) f32
    s = jnp.maximum(pooled @ w1f.T + b1f, 0.0)                # (N, Csq)
    scale = jax.nn.sigmoid(s @ w2f.T + b2f)[:, :, None]       # (N, C, 1) f32

    # Pass 2: apply the scale with large lane-dense tiles, fully parallel grid.
    # Alias only when x2 is the kernel-created padded temporary (safe to reuse).
    alias = {0: 0} if HWp != HW else {}
    out = pl.pallas_call(
        _se_apply_kernel,
        out_shape=jax.ShapeDtypeStruct((N, C, HWp), x.dtype),
        grid_spec=pltpu.PrefetchScalarGridSpec(
            num_scalar_prefetch=0,
            grid=(N, n_hw),
            in_specs=[
                pl.BlockSpec((1, C, thw), lambda n, h: (n, 0, h)),
                pl.BlockSpec((1, C, 1), lambda n, h: (n, 0, 0)),
            ],
            out_specs=pl.BlockSpec((1, C, thw), lambda n, h: (n, 0, h)),
        ),
        compiler_params=pltpu.CompilerParams(
            dimension_semantics=("parallel", "parallel"),
            vmem_limit_bytes=vmem_limit),
        cost_estimate=pl.CostEstimate(
            flops=int(N * C * HWp),
            transcendentals=0,
            bytes_accessed=int(2 * N * C * HWp * itemsize)),
        input_output_aliases=alias,
    )(x2, scale)

    if HWp != HW:
        out = out[:, :, :HW]
    return out.reshape(N, C, H, W)


def _reference(x, w1, b1, w2, b2):
    # plain-JAX reference mirroring the PyTorch forward
    pooled = jnp.mean(x, axis=(2, 3), keepdims=True)                  # (N, C, 1, 1)
    s = jnp.einsum("sc,ncij->nsij", w1, pooled) + b1[None, :, None, None]
    s = jnp.maximum(s, 0.0)
    s = jnp.einsum("cs,nsij->ncij", w2, s) + b2[None, :, None, None]
    s = jax.nn.sigmoid(s)
    return s * x


if __name__ == "__main__":
    key = jax.random.PRNGKey(0)
    k_x, k_w1, k_b1, k_w2, k_b2, k_x2 = jax.random.split(key, 6)

    N, C, H, W = 2, 4, 16, 16
    Csq = 2

    x = jax.random.normal(k_x, (N, C, H, W), dtype=jnp.float32)
    # deterministic synthetic params (Conv2d 1x1 weights squeezed to 2-D)
    w1 = jax.random.normal(k_w1, (Csq, C), dtype=jnp.float32) * 0.5
    b1 = jax.random.normal(k_b1, (Csq,), dtype=jnp.float32) * 0.1
    w2 = jax.random.normal(k_w2, (C, Csq), dtype=jnp.float32) * 0.5
    b2 = jax.random.normal(k_b2, (C,), dtype=jnp.float32) * 0.1

    ref = _reference(x, w1, b1, w2, b2)

    # 1) default single-pass fused path (HW = 256)
    out = jax.block_until_ready(squeeze_excitation(x, w1, b1, w2, b2))
    assert out.shape == (N, C, H, W)
    assert jnp.allclose(out, ref, atol=1e-5, rtol=1e-5)

    # 2) two-pass (v7x-style) fallback, forced with 128-lane tiles so the HW reduction
    #    actually spans multiple grid steps
    out2 = jax.block_until_ready(
        squeeze_excitation(x, w1, b1, w2, b2, force_two_pass=True, lane_tile=128))
    assert jnp.allclose(out2, ref, atol=1e-5, rtol=1e-5)

    # 3) non-128-multiple spatial (12x12 -> HW=144): unpadded single-pass, masked tail store
    xb = jax.random.normal(k_x2, (N, C, 12, 12), dtype=jnp.float32)
    refb = _reference(xb, w1, b1, w2, b2)
    outb = jax.block_until_ready(squeeze_excitation(xb, w1, b1, w2, b2))
    assert jnp.allclose(outb, refb, atol=1e-5, rtol=1e-5)

    # 4) forced two-pass on non-tile-multiple HW exercises the padded + aliased apply pass
    out2b = jax.block_until_ready(
        squeeze_excitation(xb, w1, b1, w2, b2, force_two_pass=True, lane_tile=128))
    assert jnp.allclose(out2b, refb, atol=1e-5, rtol=1e-5)

    print("KERNEL_OK")
</pallas_src>

<mosaic_0001>
module attributes {stable_mosaic.version = 11 : i64} {
  func.func @_se_fused_kernel(%arg0: i32, %arg1: memref<1x4x256xf32, #tpu.memory_space<vmem>>, %arg2: memref<2x4xf32, #tpu.memory_space<vmem>>, %arg3: memref<2x1xf32, #tpu.memory_space<vmem>>, %arg4: memref<4x2xf32, #tpu.memory_space<vmem>>, %arg5: memref<4x1xf32, #tpu.memory_space<vmem>>, %arg6: memref<1x4x256xf32, #tpu.memory_space<vmem>>) attributes {dimension_semantics = [#tpu.dimension_semantics<parallel>], iteration_bounds = array<i64: 2>, scalar_prefetch = 0 : i64, scratch_operands = 0 : i64, tpu.core_type = #tpu.core_type<tc>, window_params = [{transform_indices = @transform_0, window_bounds = array<i64: 1, 4, 256>}, {pipeline_mode = #tpu.pipeline_mode<synchronous>, transform_indices = @transform_1, window_bounds = array<i64: 2, 4>}, {pipeline_mode = #tpu.pipeline_mode<synchronous>, transform_indices = @transform_2, window_bounds = array<i64: 2, 1>}, {pipeline_mode = #tpu.pipeline_mode<synchronous>, transform_indices = @transform_3, window_bounds = array<i64: 4, 2>}, {pipeline_mode = #tpu.pipeline_mode<synchronous>, transform_indices = @transform_4, window_bounds = array<i64: 4, 1>}, {transform_indices = @transform_5, window_bounds = array<i64: 1, 4, 256>}]} {
    %c0 = arith.constant 0 : index
    %c0_0 = arith.constant 0 : index
    %c0_1 = arith.constant 0 : index
    %0 = vector.load %arg1[%c0, %c0_0, %c0_1] : memref<1x4x256xf32, #tpu.memory_space<vmem>>, vector<1x4x256xf32>
    %1 = vector.shape_cast %0 : vector<1x4x256xf32> to vector<4x256xf32>
    %cst = arith.constant dense<0.000000e+00> : vector<4xf32>
    %2 = vector.multi_reduction <add>, %1, %cst [1] : vector<4x256xf32> to vector<4xf32>
    %3 = vector.shape_cast %2 : vector<4xf32> to vector<4x1xf32>
    %c0_2 = arith.constant 0 : index
    %c0_3 = arith.constant 0 : index
    %4 = vector.load %arg2[%c0_2, %c0_3] : memref<2x4xf32, #tpu.memory_space<vmem>>, vector<2x4xf32>
    %cst_4 = arith.constant dense<0.000000e+00> : vector<2x1xf32>
    %5 = tpu.matmul %4, %3, %cst_4 {dimension_numbers = #tpu.dot_dimension_numbers<[1], [0], [0], [1], [0, 0, 1, 1], [], []>} : vector<2x4xf32>, vector<4x1xf32>, vector<2x1xf32> -> vector<2x1xf32>
    %c0_5 = arith.constant 0 : index
    %c0_6 = arith.constant 0 : index
    %6 = vector.load %arg3[%c0_5, %c0_6] : memref<2x1xf32, #tpu.memory_space<vmem>>, vector<2x1xf32>
    %7 = arith.addf %5, %6 : vector<2x1xf32>
    %cst_7 = arith.constant 0.000000e+00 : f32
    %8 = vector.broadcast %cst_7 : f32 to vector<2x1xf32>
    %9 = arith.maximumf %7, %8 : vector<2x1xf32>
    %c0_8 = arith.constant 0 : index
    %c0_9 = arith.constant 0 : index
    %10 = vector.load %arg4[%c0_8, %c0_9] : memref<4x2xf32, #tpu.memory_space<vmem>>, vector<4x2xf32>
    %cst_10 = arith.constant dense<0.000000e+00> : vector<4x1xf32>
    %11 = tpu.matmul %10, %9, %cst_10 {dimension_numbers = #tpu.dot_dimension_numbers<[1], [0], [0], [1], [0, 0, 1, 1], [], []>} : vector<4x2xf32>, vector<2x1xf32>, vector<4x1xf32> -> vector<4x1xf32>
    %c0_11 = arith.constant 0 : index
    %c0_12 = arith.constant 0 : index
    %12 = vector.load %arg5[%c0_11, %c0_12] : memref<4x1xf32, #tpu.memory_space<vmem>>, vector<4x1xf32>
    %13 = arith.addf %11, %12 : vector<4x1xf32>
    %14 = arith.negf %13 : vector<4x1xf32>
    %15 = math.exp %14 : vector<4x1xf32>
    %cst_13 = arith.constant 1.000000e+00 : f32
    %16 = vector.broadcast %cst_13 : f32 to vector<4x1xf32>
    %17 = arith.addf %16, %15 : vector<4x1xf32>
    %18 = arith.divf %16, %17 : vector<4x1xf32>
    %19 = vector.broadcast %18 : vector<4x1xf32> to vector<4x256xf32>
    %20 = arith.mulf %1, %19 : vector<4x256xf32>
    %c0_14 = arith.constant 0 : index
    %c0_15 = arith.constant 0 : index
    %c0_16 = arith.constant 0 : index
    %21 = vector.load %arg6[%c0_14, %c0_15, %c0_16] : memref<1x4x256xf32, #tpu.memory_space<vmem>>, vector<1x4x256xf32>
    %22 = vector.shape_cast %21 : vector<1x4x256xf32> to vector<4x256xf32>
    %23 = vector.shape_cast %20 : vector<4x256xf32> to vector<1x4x256xf32>
    tpu.vector_store %arg6[%c0_14, %c0_15, %c0_16], %23 {strides = array<i32>} : memref<1x4x256xf32, #tpu.memory_space<vmem>>, vector<1x4x256xf32>,
    return
  }
  func.func @transform_0(%arg0: i32) -> (i32, i32, i32) {
    %c0_i32 = arith.constant 0 : i32
    %c0_i32_0 = arith.constant 0 : i32
    %c0_i32_1 = arith.constant 0 : i32
    return %arg0, %c0_i32, %c0_i32_0 : i32, i32, i32
  }
  func.func @transform_1(%arg0: i32) -> (i32, i32) {
    %c0_i32 = arith.constant 0 : i32
    %c0_i32_0 = arith.constant 0 : i32
    %c0_i32_1 = arith.constant 0 : i32
    return %c0_i32, %c0_i32_0 : i32, i32
  }
  func.func @transform_2(%arg0: i32) -> (i32, i32) {
    %c0_i32 = arith.constant 0 : i32
    %c0_i32_0 = arith.constant 0 : i32
    %c0_i32_1 = arith.constant 0 : i32
    return %c0_i32, %c0_i32_0 : i32, i32
  }
  func.func @transform_3(%arg0: i32) -> (i32, i32) {
    %c0_i32 = arith.constant 0 : i32
    %c0_i32_0 = arith.constant 0 : i32
    %c0_i32_1 = arith.constant 0 : i32
    return %c0_i32, %c0_i32_0 : i32, i32
  }
  func.func @transform_4(%arg0: i32) -> (i32, i32) {
    %c0_i32 = arith.constant 0 : i32
    %c0_i32_0 = arith.constant 0 : i32
    %c0_i32_1 = arith.constant 0 : i32
    return %c0_i32, %c0_i32_0 : i32, i32
  }
  func.func @transform_5(%arg0: i32) -> (i32, i32, i32) {
    %c0_i32 = arith.constant 0 : i32
    %c0_i32_0 = arith.constant 0 : i32
    %c0_i32_1 = arith.constant 0 : i32
    return %arg0, %c0_i32, %c0_i32_0 : i32, i32, i32
  }
}

</mosaic_0001>

<llo_original>
// kernel: tpu_custom_call.1
$region0: #{tpu_custom_call.1}
  #allocation0 [shape = 'u32[]', space=smem, size = 0x4, offset = 0x4, fixed_abs, tag = 'smem constant byte address 0x4 - core index']
  #allocation1 [shape = 'u32[72,128]{1,0:T(1,128)}', space=vmem, size = 0x9000, scoped, tag = 'internal scratch']
  %s0 = inlined_call_operand.hbm [shape: f32[2,4,256], index: 0, kind: input, shape index: {}]
  %s1 = inlined_call_operand.vmem [shape: f32[2,4], index: 1, kind: input, shape index: {}]
  %s2 = inlined_call_operand.vmem [shape: f32[2,1], index: 2, kind: input, shape index: {}]
  %s3 = inlined_call_operand.vmem [shape: f32[4,2], index: 3, kind: input, shape index: {}]
  %s4 = inlined_call_operand.vmem [shape: f32[4,1], index: 4, kind: input, shape index: {}]
  %s5 = inlined_call_operand.hbm [shape: f32[2,4,256], index: 5, kind: output, shape index: {}]
  %s6 = sld [smem:[#allocation0]]
  $region57: #{tpu_custom_call.1} parent=0
    _
  %s8 = ssub.s32 1, %s6
  %s9 = scalar_select 0, %s8, %s6
  $region1: #{tpu_custom_call.1} parent=0
    #allocation2 [shape = 'u8[8192]{0}', space=vmem, size = 0x2000, scoped, tag = 'input window, operand 0']
    #allocation3 [shape = 's32[2]{0}', space=sflag, size = 0x8, scoped, tag = 'scoped memory for tpu_custom_call.1']
    #allocation4 [shape = 's32[2]{0}', space=sflag, size = 0x8, scoped, tag = 'scoped memory for tpu_custom_call.1']
    #allocation5 [shape = 'u8[8192]{0}', space=vmem, size = 0x2000, scoped, tag = 'output window, operand 0']
    %10 = vsyncpa [#allocation3], 0
    %s11 = scalar_lea.sflag [#allocation3], 1
    %12 = vsyncpa %s11, 0
    %13 = vsyncpa [#allocation4], 0
    %s14 = scalar_lea.sflag [#allocation4], 1
    %15 = vsyncpa %s14, 0
    loop: start=0, step=1, limit=4
    $region2: #{tpu_custom_call.1} parent=1 // loop_pre_header
      _
    $region3: #{tpu_custom_call.1} parent=1 // loop_header
      %s17 = sphi 0, %s21
      %p18 = scmp.ge.s32.totalorder %s17, 4
      %s27 = sphi 0, %s29
      %s30 = sphi 0, %s27
      %s31 = sphi 0, %s30
      %s47 = sphi 0, %s31
      %s51 = sphi 0, %s51
      %s53 = sphi 0, %s51
      %s54 = sphi 0, %s53
      %s68 = sphi 0, %s54
      %s72 = sphi 0, %s72
      %s74 = sphi 0, %s72
      %s75 = sphi 0, %s74
      %s89 = sphi 0, %s75
      %s93 = sphi 0, %s93
      %s95 = sphi 0, %s93
      %s96 = sphi 0, %s95
      %s110 = sphi 0, %s96
      %s114 = sphi 0, %s114
      %s116 = sphi 0, %s114
      %s117 = sphi 0, %s116
      %s131 = sphi 0, %s117
      %s137 = sphi 0, %s139
      %s140 = sphi 0, %s137
      %s141 = sphi 0, %s140
      %s157 = sphi 0, %s141
    $region4: #{tpu_custom_call.1} parent=1 // loop_header_branch
      %20 = sbr.rel (%p18) target = $region8
    $region5: #{tpu_custom_call.1} parent=1 // loop_body
      %s22 = ssub.s32 %s17, 1
      %s23 = ssub.s32 %s17, 2
      %s24 = sadd.s32 %s17, 1
      %s25 = ssub.s32 %s17, %s24
      %p26 = scmp.eq.s32.totalorder %s25, 0
      %s28 = sadd.s32 %s27, 1
      %s29 = scalar_select %p26, %s27, %s28
      %p32 = pneg %p26
      %p33 = scmp.eq.s32.totalorder %s17, 1
      %p34 = por %p32, %p33
      %p35 = scmp.ne.s32.totalorder %s27, %s30
      %p36 = scmp.eq.s32.totalorder %s17, 0
      %p37 = por %p35, %p36
      %p38 = scmp.ne.s32.totalorder %s27, %s30
      %p39 = scmp.eq.s32.totalorder %s22, 1
      %p40 = por %p38, %p39
      %p41 = scmp.ne.s32.totalorder %s30, %s31
      %p42 = scmp.eq.s32.totalorder %s22, 0
      %p43 = por %p41, %p42
      %p44 = scmp.ne.s32.totalorder %s30, %s31
      %p45 = scmp.eq.s32.totalorder %s23, 1
      %p46 = por %p44, %p45
      %p48 = scmp.ne.s32.totalorder %s31, %s47
      %p49 = scmp.eq.s32.totalorder %s23, 0
      %p50 = por %p48, %p49
      %s52 = sadd.s32 %s51, 1
      %p55 = scmp.eq.s32.totalorder %s17, 1
      %p56 = scmp.ne.s32.totalorder %s51, %s53
      %p57 = scmp.eq.s32.totalorder %s17, 0
      %p58 = por %p56, %p57
      %p59 = scmp.ne.s32.totalorder %s51, %s53
      %p60 = scmp.eq.s32.totalorder %s22, 1
      %p61 = por %p59, %p60
      %p62 = scmp.ne.s32.totalorder %s53, %s54
      %p63 = scmp.eq.s32.totalorder %s22, 0
      %p64 = por %p62, %p63
      %p65 = scmp.ne.s32.totalorder %s53, %s54
      %p66 = scmp.eq.s32.totalorder %s23, 1
      %p67 = por %p65, %p66
      %p69 = scmp.ne.s32.totalorder %s54, %s68
      %p70 = scmp.eq.s32.totalorder %s23, 0
      %p71 = por %p69, %p70
      %s73 = sadd.s32 %s72, 1
      %p76 = scmp.eq.s32.totalorder %s17, 1
      %p77 = scmp.ne.s32.totalorder %s72, %s74
      %p78 = scmp.eq.s32.totalorder %s17, 0
      %p79 = por %p77, %p78
      %p80 = scmp.ne.s32.totalorder %s72, %s74
      %p81 = scmp.eq.s32.totalorder %s22, 1
      %p82 = por %p80, %p81
      %p83 = scmp.ne.s32.totalorder %s74, %s75
      %p84 = scmp.eq.s32.totalorder %s22, 0
      %p85 = por %p83, %p84
      %p86 = scmp.ne.s32.totalorder %s74, %s75
      %p87 = scmp.eq.s32.totalorder %s23, 1
      %p88 = por %p86, %p87
      %p90 = scmp.ne.s32.totalorder %s75, %s89
      %p91 = scmp.eq.s32.totalorder %s23, 0
      %p92 = por %p90, %p91
      %s94 = sadd.s32 %s93, 1
      %p97 = scmp.eq.s32.totalorder %s17, 1
      %p98 = scmp.ne.s32.totalorder %s93, %s95
      %p99 = scmp.eq.s32.totalorder %s17, 0
      %p100 = por %p98, %p99
      %p101 = scmp.ne.s32.totalorder %s93, %s95
      %p102 = scmp.eq.s32.totalorder %s22, 1
      %p103 = por %p101, %p102
      %p104 = scmp.ne.s32.totalorder %s95, %s96
      %p105 = scmp.eq.s32.totalorder %s22, 0
      %p106 = por %p104, %p105
      %p107 = scmp.ne.s32.totalorder %s95, %s96
      %p108 = scmp.eq.s32.totalorder %s23, 1
      %p109 = por %p107, %p108
      %p111 = scmp.ne.s32.totalorder %s96, %s110
      %p112 = scmp.eq.s32.totalorder %s23, 0
      %p113 = por %p111, %p112
      %s115 = sadd.s32 %s114, 1
      %p118 = scmp.eq.s32.totalorder %s17, 1
      %p119 = scmp.ne.s32.totalorder %s114, %s116
      %p120 = scmp.eq.s32.totalorder %s17, 0
      %p121 = por %p119, %p120
      %p122 = scmp.ne.s32.totalorder %s114, %s116
      %p123 = scmp.eq.s32.totalorder %s22, 1
      %p124 = por %p122, %p123
      %p125 = scmp.ne.s32.totalorder %s116, %s117
      %p126 = scmp.eq.s32.totalorder %s22, 0
      %p127 = por %p125, %p126
      %p128 = scmp.ne.s32.totalorder %s116, %s117
      %p129 = scmp.eq.s32.totalorder %s23, 1
      %p130 = por %p128, %p129
      %p132 = scmp.ne.s32.totalorder %s117, %s131
      %p133 = scmp.eq.s32.totalorder %s23, 0
      %p134 = por %p132, %p133
      %s135 = ssub.s32 %s17, %s24
      %p136 = scmp.eq.s32.totalorder %s135, 0
      %s138 = sadd.s32 %s137, 1
      %s139 = scalar_select %p136, %s137, %s138
      %p142 = pneg %p136
      %p143 = scmp.eq.s32.totalorder %s17, 1
      %p144 = por %p142, %p143
      %p145 = scmp.ne.s32.totalorder %s137, %s140
      %p146 = scmp.eq.s32.totalorder %s17, 0
      %p147 = por %p145, %p146
      %p148 = scmp.ne.s32.totalorder %s137, %s140
      %p149 = scmp.eq.s32.totalorder %s22, 1
      %p150 = por %p148, %p149
      %p151 = scmp.ne.s32.totalorder %s140, %s141
      %p152 = scmp.eq.s32.totalorder %s22, 0
      %p153 = por %p151, %p152
      %p154 = scmp.ne.s32.totalorder %s140, %s141
      %p155 = scmp.eq.s32.totalorder %s23, 1
      %p156 = por %p154, %p155
      %p158 = scmp.ne.s32.totalorder %s141, %s157
      %p159 = scmp.eq.s32.totalorder %s23, 0
      %p160 = por %p158, %p159
      %p161 = scmp.le.s32.totalorder 1, %s17
      %p162 = scmp.lt.s32.totalorder %s17, 3
      %p163 = pnand %p161, %p162
      %p164 = pneg %p163
      // Predicated region
      $region9: #{tpu_custom_call.1} parent=5 // pred_check
        _
      $region10: #{tpu_custom_call.1} parent=5 // pred_check_branch
        %166 = sbr.rel (%p163) target = $region12
      $region11: #{tpu_custom_call.1} parent=5 // pred_region
        %s167 = ssub.s32 %s17, 1
        // Predicated region
        $region13: #{tpu_custom_call.1} parent=11 // pred_check
          %p168 = pneg %p64
        $region14: #{tpu_custom_call.1} parent=11 // pred_check_branch
          %170 = sbr.rel (%p168) target = $region16
        $region15: #{tpu_custom_call.1} parent=11 // pred_region
          _
        $region16: #{tpu_custom_call.1} parent=11 // pred_fallthru
          _
        // Predicated region
        $region17: #{tpu_custom_call.1} parent=11 // pred_check
          %p171 = pneg %p85
        $region18: #{tpu_custom_call.1} parent=11 // pred_check_branch
          %173 = sbr.rel (%p171) target = $region20
        $region19: #{tpu_custom_call.1} parent=11 // pred_region
          _
        $region20: #{tpu_custom_call.1} parent=11 // pred_fallthru
          _
        // Predicated region
        $region21: #{tpu_custom_call.1} parent=11 // pred_check
          %p174 = pneg %p106
        $region22: #{tpu_custom_call.1} parent=11 // pred_check_branch
          %176 = sbr.rel (%p174) target = $region24
        $region23: #{tpu_custom_call.1} parent=11 // pred_region
          _
        $region24: #{tpu_custom_call.1} parent=11 // pred_fallthru
          _
        // Predicated region
        $region25: #{tpu_custom_call.1} parent=11 // pred_check
          %p177 = pneg %p127
        $region26: #{tpu_custom_call.1} parent=11 // pred_check_branch
          %179 = sbr.rel (%p177) target = $region28
        $region27: #{tpu_custom_call.1} parent=11 // pred_region
          _
        $region28: #{tpu_custom_call.1} parent=11 // pred_fallthru
          _
      $region12: #{tpu_custom_call.1} parent=5 // pred_fallthru
        _
      %p180 = scmp.lt.s32.totalorder %s17, 2
      // Predicated region
      $region29: #{tpu_custom_call.1} parent=5 // pred_check
        %p181 = pneg %p180
      $region30: #{tpu_custom_call.1} parent=5 // pred_check_branch
        %183 = sbr.rel (%p181) target = $region32
      $region31: #{tpu_custom_call.1} parent=5 // pred_region
        // Predicated region
        $region33: #{tpu_custom_call.1} parent=31 // pred_check
          %p184 = pneg %p37
        $region34: #{tpu_custom_call.1} parent=31 // pred_check_branch
          %186 = sbr.rel (%p184) target = $region36
        $region35: #{tpu_custom_call.1} parent=31 // pred_region
          %s187 = sand.u32 %s27, 1
          %s188 = scalar_lea.sflag [#allocation3], %s187
          %s189 = sand.u32 %s27, 1
          %s190 = smul.addr %s189, 8
          %s191 = scalar_lea.vmem [#allocation2], %s190
          %193 = vsyncadd %s188, 0
          %s194 = smul.addr %s17, 2
          %s195 = smul.addr %s194, 4
          %s196 = scalar_lea.hbm %s0, %s195
          %s198 = sshll.u32 %s196, 4
          %s199 = int_to_ptr.hbm [resolvable:$true] %s198
          %s200 = sshll.u32 %s191, 4
          %s201 = int_to_ptr.vmem [resolvable:$true] %s200
          %203 = dma.hbm_to_vmem [thread:$0]  %s199, 128, %s201, %s188
        $region36: #{tpu_custom_call.1} parent=31 // pred_fallthru
          _
      $region32: #{tpu_custom_call.1} parent=5 // pred_fallthru
        _
      %p204 = scmp.le.s32.totalorder 1, %s17
      %p205 = scmp.lt.s32.totalorder %s17, 3
      %p206 = pnand %p204, %p205
      %p207 = pneg %p206
      // Predicated region
      $region37: #{tpu_custom_call.1} parent=5 // pred_check
        _
      $region38: #{tpu_custom_call.1} parent=5 // pred_check_branch
        %209 = sbr.rel (%p206) target = $region40
      $region39: #{tpu_custom_call.1} parent=5 // pred_region
        %s210 = ssub.s32 %s17, 1
        %s211 = sand.u32 %s30, 1
        %s212 = scalar_lea.sflag [#allocation3], %s211
        %s213 = sand.u32 %s30, 1
        %s214 = smul.addr %s213, 8
        %s215 = scalar_lea.vmem [#allocation2], %s214
        // Predicated region
        $region41: #{tpu_custom_call.1} parent=39 // pred_check
          %p216 = pneg %p43
        $region42: #{tpu_custom_call.1} parent=39 // pred_check_branch
          %218 = sbr.rel (%p216) target = $region44
        $region43: #{tpu_custom_call.1} parent=39 // pred_region
          %220 = dma.done %s212, 128
        $region44: #{tpu_custom_call.1} parent=39 // pred_fallthru
          _
        %s221 = sand.u32 %s30, 1
        %s222 = scalar_lea.sflag [#allocation3], %s221
        %s223 = sand.u32 %s30, 1
        %s224 = smul.addr %s223, 8
        %s225 = scalar_lea.vmem [#allocation2], %s224
        %p226 = pneg %p43
        %p227 = pneg %p40
        %p228 = pneg %p64
        %p229 = pneg %p61
        %p230 = pneg %p85
        %p231 = pneg %p82
        %p232 = pneg %p106
        %p233 = pneg %p103
        %p234 = pneg %p127
        %p235 = pneg %p124
        %p236 = pneg %p153
        %p237 = pneg %p150
        %s238 = sand.u32 %s140, 1
        %s239 = scalar_lea.sflag [#allocation4], %s238
        %s240 = sand.u32 %s140, 1
        %s241 = smul.addr %s240, 8
        %s242 = scalar_lea.vmem [#allocation5], %s241
        %v243 = vld [vmem:[%s215] sm:$0xff]
        %245 = vst [vmem:[#allocation1] ss:$2 sm:$0xff] %v243
        %v246 = vld.sshfl [vmem:[#allocation1] sm:$0xff pattern:$0x75316420]
        %v247 = vld.sshfl [vmem:[#allocation1 + $0x8] sm:$0xff pattern:$0x75316420]
        %vm250 = vcmask 1043456
        %v251 = vsel %vm250, %v246, 0.0
        %v252 = vsel %vm250, %v247, 0.0
        %v253 = vadd.f32 %v251, %v252
        %254 = vadd.xlane.f32.xlu0 %v253
        %v255 = vpop.xlane.xlu0 %254
        %v256 = vld [vmem:[%s1] sm:$0x3]
        %v257 = vld [vmem:[%s2] sm:$0x3]
        %vm258 = vcmask 31744
        %v260 = vsel %vm258, %v256, 0
        %v263 = vsel %vm250, %v255, 0
        %265 = vmatpush.msra.mxu0 0.0
        %266 = vmatpush.msra.mxu0 0.0
        %267 = vmatpush.msra.mxu0 0.0
        %268 = vmatpush.msra.mxu0 0.0
        %269 = vmatpush.msra.mxu0 0.0
        %270 = vmatpush.msra.mxu0 0.0
        %271 = vmatpush.msra.mxu0 0.0
        %272 = vmatpush.msra.mxu0 0.0
        %273 = vmatpush.msra.mxu0 0.0
        %274 = vmatpush.msra.mxu0 0.0
        %275 = vmatpush.msra.mxu0 0.0
        %276 = vmatpush.msra.mxu0 0.0
        %277 = vmatpush.msra.mxu0 0.0
        %278 = vmatpush.msra.mxu0 0.0
        %279 = vmatpush.msra.mxu0 0.0
        %280 = vmatpush.msra.mxu0 %v263
        %281 = vmatmul.f32.gmra.mxu0 %v260
        %v282 = vpop.f32.mrf.mxu0
        %v283 = vadd.f32 %v257, %v282
        %284 = vdwg.mxu0
        %v285 = vmax.f32 %v283, 0.0
        %v286 = vld [vmem:[%s3] sm:$0xf]
        %v287 = vld [vmem:[%s4] sm:$0xf]
        %vm288 = vcmask 15360
        %v290 = vsel %vm288, %v286, 0
        %vm292 = vcmask 1041408
        %v294 = vsel %vm292, %v285, 0
        %296 = vmatpush.msra.mxu0 0.0
        %297 = vmatpush.msra.mxu0 0.0
        %298 = vmatpush.msra.mxu0 0.0
        %299 = vmatpush.msra.mxu0 0.0
        %300 = vmatpush.msra.mxu0 0.0
        %301 = vmatpush.msra.mxu0 0.0
        %302 = vmatpush.msra.mxu0 0.0
        %303 = vmatpush.msra.mxu0 0.0
        %304 = vmatpush.msra.mxu0 0.0
        %305 = vmatpush.msra.mxu0 0.0
        %306 = vmatpush.msra.mxu0 0.0
        %307 = vmatpush.msra.mxu0 0.0
        %308 = vmatpush.msra.mxu0 0.0
        %309 = vmatpush.msra.mxu0 0.0
        %310 = vmatpush.msra.mxu0 0.0
        %311 = vmatpush.msra.mxu0 %v294
        %312 = vmatmul.f32.gmra.mxu0 %v290
        %v313 = vpop.f32.mrf.mxu0
        %v314 = vadd.f32 %v287, %v313
        %315 = vdwg.mxu0
        %v316 = vxor.u32 %v314, 2147483648
        %v317 = vmul.f32 %v316, 1.442695
        %v318 = vpow.pop %v317
        %v319 = vadd.f32 %v318, 1.0
        %v320 = vrcp.pop %v319
        %v321 = vmul.f32 %v319, %v320
        %v322 = vsub.f32 1.0, %v321
        %v323 = vmul.f32 %v320, %v322
        %v324 = vadd.f32 %v320, %v323
        %vm325 = vweird.f32 %v319
        %vm326 = vweird.f32 %v320
        %vm327 = vmor %vm325, %vm326
        %v328 = vsel %vm327, %v320, %v324
        %v329 = vand.u32 2147483647, %v319
        %vm330 = vcmp.eq.f32.partialorder %v329, 8.507059e+37
        %v331 = vand.u32 %v319, 2147483648
        %v332 = vor.u32 1.1754944e-38, %v331
        %v333 = vsel %vm330, %v332, %v328
        %v334 = vmul.f32 1.0, %v333
        %336 = vset.pattern.permute.xlu0 0
        %337 = vperm.xlu0 %336, %v334
        %v338 = vpop.permute.xlu0 %337
        %v340 = vunpack.c.l.s4 839922192
        %v341 = vunpack.c.0.s8 %v340
        %v342 = vperm.slane %v338, %v341
        %v344 = vmul.f32 %v243, %v342
        %345 = vst [vmem:[%s242] sm:$0xff] %v344
        %s346 = sand.u32 %s140, 1
        %s347 = scalar_lea.sflag [#allocation4], %s346
        %s348 = sand.u32 %s140, 1
        %s349 = smul.addr %s348, 8
        %s350 = scalar_lea.vmem [#allocation5], %s349
        // Predicated region
        $region45: #{tpu_custom_call.1} parent=39 // pred_check
          %p351 = pneg %p150
        $region46: #{tpu_custom_call.1} parent=39 // pred_check_branch
          %353 = sbr.rel (%p351) target = $region48
        $region47: #{tpu_custom_call.1} parent=39 // pred_region
          %355 = vsyncadd %s347, 0
          %s356 = smul.addr %s22, 2
          %s357 = smul.addr %s356, 4
          %s358 = scalar_lea.hbm %s5, %s357
          %s360 = sshll.u32 %s350, 4
          %s361 = int_to_ptr.vmem [resolvable:$true] %s360
          %s362 = sshll.u32 %s358, 4
          %s363 = int_to_ptr.hbm [resolvable:$true] %s362
          %365 = dma.vmem_to_hbm [thread:$0]  %s361, 128, %s363, %s347
        $region48: #{tpu_custom_call.1} parent=39 // pred_fallthru
          _
      $region40: #{tpu_custom_call.1} parent=5 // pred_fallthru
        _
      %p366 = scmp.le.s32.totalorder 2, %s17
      // Predicated region
      $region49: #{tpu_custom_call.1} parent=5 // pred_check
        %p367 = pneg %p366
      $region50: #{tpu_custom_call.1} parent=5 // pred_check_branch
        %369 = sbr.rel (%p367) target = $region52
      $region51: #{tpu_custom_call.1} parent=5 // pred_region
        %s370 = ssub.s32 %s17, 2
        // Predicated region
        $region53: #{tpu_custom_call.1} parent=51 // pred_check
          %p371 = pneg %p156
        $region54: #{tpu_custom_call.1} parent=51 // pred_check_branch
          %373 = sbr.rel (%p371) target = $region56
        $region55: #{tpu_custom_call.1} parent=51 // pred_region
          %s374 = sand.u32 %s141, 1
          %s375 = scalar_lea.sflag [#allocation4], %s374
          %s376 = sand.u32 %s141, 1
          %s377 = smul.addr %s376, 8
          %s378 = scalar_lea.vmem [#allocation5], %s377
          %380 = dma.done %s375, 128
        $region56: #{tpu_custom_call.1} parent=51 // pred_fallthru
          _
      $region52: #{tpu_custom_call.1} parent=5 // pred_fallthru
        _
    $region6: #{tpu_custom_call.1} parent=1 // loop_footer
      %s21 = sadd.s32 1, %s17
    $region7: #{tpu_custom_call.1} parent=1 // loop_footer_branch
      %16 = sbr.rel target = $region3
    $region8: #{tpu_custom_call.1} parent=1 // loop_exit
      _
    %381 = vsyncpa [#allocation3], 1
    %s382 = scalar_lea.sflag [#allocation3], 1
    %383 = vsyncpa %s382, 1
    %384 = vsyncpa [#allocation4], 1
    %s385 = scalar_lea.sflag [#allocation4], 1
    %386 = vsyncpa %s385, 1

</llo_original>
